<compile_context>
chip_gen: v5e
topology: v5e:2x2
jax: 0.10.0
libtpu: 0.0.40
codegen_flags: <defaults>
</compile_context>

<pallas_src>
import jax
import jax.numpy as jnp
from jax.experimental import pallas as pl
from jax.experimental.pallas import tpu as pltpu

N_IN = 80
H1 = 64
H2 = 32
N_ACT = 5
LANES = 128          # lane-dense padded width for the hidden layers
OUT_PAD = 8          # padded width of the logits / probability output
NEG_BIG = -1e30      # "minus infinity" bias for padded logit lanes


def _round_up(x, m):
    return ((x + m - 1) // m) * m


def _policy_kernel(x_ref, w1_ref, b1_ref, w2_ref, b2_ref, w3_ref, b3_ref,
                   out_ref):
    bf16 = jnp.bfloat16
    x = x_ref[...]                                               # (TB, 80) bf16

    # Layer 1: (TB,80)@(80,128); cols 64..127 of W1/b1 are zero -> ReLU -> 0
    h1 = jnp.dot(x, w1_ref[...], preferred_element_type=jnp.float32)
    h1 = jnp.maximum(h1 + b1_ref[...], 0.0)                      # (TB,128) f32

    # Layer 2: (TB,128)@(128,128); rows 64.. / cols 32.. of W2 are zero
    h2 = jnp.dot(h1.astype(bf16), w2_ref[...],
                 preferred_element_type=jnp.float32)
    h2 = jnp.maximum(h2 + b2_ref[...], 0.0)                      # (TB,128) f32

    # Layer 3: (TB,128)@(128,8); padded logit lanes 5..7 get bias = -1e30
    logits = jnp.dot(h2.astype(bf16), w3_ref[...],
                     preferred_element_type=jnp.float32)
    logits = logits + b3_ref[...]                                # (TB, 8) f32

    # Numerically stable softmax over the 8 lanes; padded lanes exp() to 0.
    m = jnp.max(logits, axis=-1, keepdims=True)
    e = jnp.exp(logits - m)
    denom = jnp.sum(e, axis=-1, keepdims=True)
    out_ref[...] = e * pl.reciprocal(denom)                      # exact recip


def prepare_params(params):
    """One-time padding/casting of torch-style Linear params.

    params = (w1, b1, w2, b2, w3, b3) with weights stored (in, out) so the
    kernel computes x @ W + b (== torch's x @ W.T with W stored (out, in)).
    """
    w1, b1, w2, b2, w3, b3 = params
    f32, bf16 = jnp.float32, jnp.bfloat16
    w1p = jnp.zeros((N_IN, LANES), bf16).at[:, :H1].set(w1.astype(bf16))
    b1p = jnp.zeros((1, LANES), f32).at[:, :H1].set(
        b1.reshape(1, H1).astype(f32))
    w2p = jnp.zeros((LANES, LANES), bf16).at[:H1, :H2].set(w2.astype(bf16))
    b2p = jnp.zeros((1, LANES), f32).at[:, :H2].set(
        b2.reshape(1, H2).astype(f32))
    w3p = jnp.zeros((LANES, OUT_PAD), bf16).at[:H2, :N_ACT].set(w3.astype(bf16))
    b3p = jnp.full((1, OUT_PAD), NEG_BIG, f32).at[:, :N_ACT].set(
        b3.reshape(1, N_ACT).astype(f32))
    return (w1p, b1p, w2p, b2p, w3p, b3p)


def policy_forward(state, prepared, *, block_batch=2048):
    """Compute Categorical probabilities mu = actor(state).

    state:    (B, 80) float array
    prepared: output of prepare_params(params)
    returns:  (B, 5) float32 probabilities (rows sum to ~1)
    """
    w1p, b1p, w2p, b2p, w3p, b3p = prepared
    B, F = state.shape
    assert F == N_IN

    x = state.astype(jnp.bfloat16)

    # Batch tile: multiple of 8 sublanes, capped at ceil(B/2) so the grid has
    # at least 2 steps (v7x megacore) whenever B is big enough to split.
    tb = min(block_batch, max(8, _round_up(pl.cdiv(B, 2), 8)))
    grid = (pl.cdiv(B, tb),)   # ragged last block handled by Pallas, no pad

    weight_bytes = ((N_IN * LANES + LANES * LANES + LANES * OUT_PAD) * 2
                    + (2 * LANES + OUT_PAD) * 4)
    cost = pl.CostEstimate(
        flops=2 * B * (N_IN * LANES + LANES * LANES + LANES * OUT_PAD),
        transcendentals=B * OUT_PAD,
        bytes_accessed=B * (N_IN * 2 + OUT_PAD * 4) + weight_bytes,
    )

    out = pl.pallas_call(
        _policy_kernel,
        out_shape=jax.ShapeDtypeStruct((B, OUT_PAD), jnp.float32),
        grid=grid,
        in_specs=[
            pl.BlockSpec((tb, N_IN), lambda i: (i, 0)),        # state tile
            pl.BlockSpec((N_IN, LANES), lambda i: (0, 0)),     # W1 (resident)
            pl.BlockSpec((1, LANES), lambda i: (0, 0)),        # b1
            pl.BlockSpec((LANES, LANES), lambda i: (0, 0)),    # W2
            pl.BlockSpec((1, LANES), lambda i: (0, 0)),        # b2
            pl.BlockSpec((LANES, OUT_PAD), lambda i: (0, 0)),  # W3
            pl.BlockSpec((1, OUT_PAD), lambda i: (0, 0)),      # b3
        ],
        out_specs=pl.BlockSpec((tb, OUT_PAD), lambda i: (i, 0)),
        compiler_params=pltpu.CompilerParams(
            dimension_semantics=("parallel",),
            vmem_limit_bytes=32 << 20),
        cost_estimate=cost,
    )(x, w1p, b1p, w2p, b2p, w3p, b3p)

    return out[:, :N_ACT]


def init_params(key):
    """Deterministic init matching torch.nn.Linear's default scheme
    (uniform(-1/sqrt(fan_in), 1/sqrt(fan_in))); weights stored as (in, out)."""
    dims = [(N_IN, H1), (H1, H2), (H2, N_ACT)]
    params = []
    for (fan_in, fan_out) in dims:
        key, kw, kb = jax.random.split(key, 3)
        bound = 1.0 / jnp.sqrt(fan_in)
        w = jax.random.uniform(kw, (fan_in, fan_out), jnp.float32,
                               minval=-bound, maxval=bound)
        b = jax.random.uniform(kb, (1, fan_out), jnp.float32,
                               minval=-bound, maxval=bound)
        params += [w, b]
    return tuple(params)


def _reference_f32(state, params):
    w1, b1, w2, b2, w3, b3 = params
    h1 = jnp.maximum(state @ w1 + b1, 0.0)
    h2 = jnp.maximum(h1 @ w2 + b2, 0.0)
    logits = h2 @ w3 + b3
    return jax.nn.softmax(logits, axis=-1)


def _reference_bf16(state, params):
    """Same bf16-input / f32-accumulate quantization the kernel uses."""
    w1, b1, w2, b2, w3, b3 = params
    bf16 = jnp.bfloat16
    h1 = jnp.maximum(jnp.dot(state.astype(bf16), w1.astype(bf16),
                             preferred_element_type=jnp.float32) + b1, 0.0)
    h2 = jnp.maximum(jnp.dot(h1.astype(bf16), w2.astype(bf16),
                             preferred_element_type=jnp.float32) + b2, 0.0)
    logits = jnp.dot(h2.astype(bf16), w3.astype(bf16),
                     preferred_element_type=jnp.float32) + b3
    return jax.nn.softmax(logits, axis=-1)


if __name__ == "__main__":
    key = jax.random.PRNGKey(0)
    params = init_params(key)
    prepared = prepare_params(params)
    forward = jax.jit(policy_forward)

    # B=16: even split into 2 grid steps; B=13: exercises the ragged last block.
    for B in (16, 13):
        key, kx = jax.random.split(key)
        state = jax.random.normal(kx, (B, N_IN), dtype=jnp.float32)

        probs = forward(state, prepared)
        probs = jax.block_until_ready(probs)
        assert probs.shape == (B, N_ACT)

        ref_q = _reference_bf16(state, params)   # same quantization as kernel
        ref_f = _reference_f32(state, params)    # pure f32 module semantics
        assert jnp.allclose(probs, ref_q, atol=1e-4, rtol=1e-4)
        assert jnp.allclose(probs, ref_f, atol=2e-2, rtol=2e-2)
        assert jnp.allclose(jnp.sum(probs, axis=-1), 1.0, atol=1e-5)

    # TODO(synk): torch.distributions.Categorical sampling/log_prob lives
    # outside the kernel; we return the probabilities that parameterize it.
    print("KERNEL_OK")
</pallas_src>

<mosaic_0001>
module attributes {stable_mosaic.version = 11 : i64} {
  func.func @_policy_kernel(%arg0: i32, %arg1: memref<8x80xbf16, #tpu.memory_space<vmem>>, %arg2: memref<80x128xbf16, #tpu.memory_space<vmem>>, %arg3: memref<1x128xf32, #tpu.memory_space<vmem>>, %arg4: memref<128x128xbf16, #tpu.memory_space<vmem>>, %arg5: memref<1x128xf32, #tpu.memory_space<vmem>>, %arg6: memref<128x8xbf16, #tpu.memory_space<vmem>>, %arg7: memref<1x8xf32, #tpu.memory_space<vmem>>, %arg8: memref<8x8xf32, #tpu.memory_space<vmem>>) attributes {dimension_semantics = [#tpu.dimension_semantics<parallel>], iteration_bounds = array<i64: 2>, scalar_prefetch = 0 : i64, scratch_operands = 0 : i64, tpu.core_type = #tpu.core_type<tc>, window_params = [{transform_indices = @transform_0, window_bounds = array<i64: 8, 80>}, {pipeline_mode = #tpu.pipeline_mode<synchronous>, transform_indices = @transform_1, window_bounds = array<i64: 80, 128>}, {pipeline_mode = #tpu.pipeline_mode<synchronous>, transform_indices = @transform_2, window_bounds = array<i64: 1, 128>}, {pipeline_mode = #tpu.pipeline_mode<synchronous>, transform_indices = @transform_3, window_bounds = array<i64: 128, 128>}, {pipeline_mode = #tpu.pipeline_mode<synchronous>, transform_indices = @transform_4, window_bounds = array<i64: 1, 128>}, {pipeline_mode = #tpu.pipeline_mode<synchronous>, transform_indices = @transform_5, window_bounds = array<i64: 128, 8>}, {pipeline_mode = #tpu.pipeline_mode<synchronous>, transform_indices = @transform_6, window_bounds = array<i64: 1, 8>}, {transform_indices = @transform_7, window_bounds = array<i64: 8, 8>}]} {
    %c0 = arith.constant 0 : index
    %c0_0 = arith.constant 0 : index
    %0 = vector.load %arg1[%c0, %c0_0] : memref<8x80xbf16, #tpu.memory_space<vmem>>, vector<8x80xbf16>
    %c0_1 = arith.constant 0 : index
    %c0_2 = arith.constant 0 : index
    %1 = vector.load %arg2[%c0_1, %c0_2] : memref<80x128xbf16, #tpu.memory_space<vmem>>, vector<80x128xbf16>
    %cst = arith.constant dense<0.000000e+00> : vector<8x128xf32>
    %2 = tpu.matmul %0, %1, %cst {dimension_numbers = #tpu.dot_dimension_numbers<[1], [0], [0], [1], [0, 0, 1, 1], [], []>} : vector<8x80xbf16>, vector<80x128xbf16>, vector<8x128xf32> -> vector<8x128xf32>
    %c0_3 = arith.constant 0 : index
    %c0_4 = arith.constant 0 : index
    %3 = vector.load %arg3[%c0_3, %c0_4] : memref<1x128xf32, #tpu.memory_space<vmem>>, vector<1x128xf32>
    %4 = vector.broadcast %3 : vector<1x128xf32> to vector<8x128xf32>
    %5 = arith.addf %2, %4 : vector<8x128xf32>
    %cst_5 = arith.constant 0.000000e+00 : f32
    %6 = vector.broadcast %cst_5 : f32 to vector<8x128xf32>
    %7 = arith.maximumf %5, %6 : vector<8x128xf32>
    %8 = arith.truncf %7 : vector<8x128xf32> to vector<8x128xbf16>
    %c0_6 = arith.constant 0 : index
    %c0_7 = arith.constant 0 : index
    %9 = vector.load %arg4[%c0_6, %c0_7] : memref<128x128xbf16, #tpu.memory_space<vmem>>, vector<128x128xbf16>
    %cst_8 = arith.constant dense<0.000000e+00> : vector<8x128xf32>
    %10 = tpu.matmul %8, %9, %cst_8 {dimension_numbers = #tpu.dot_dimension_numbers<[1], [0], [0], [1], [0, 0, 1, 1], [], []>} : vector<8x128xbf16>, vector<128x128xbf16>, vector<8x128xf32> -> vector<8x128xf32>
    %c0_9 = arith.constant 0 : index
    %c0_10 = arith.constant 0 : index
    %11 = vector.load %arg5[%c0_9, %c0_10] : memref<1x128xf32, #tpu.memory_space<vmem>>, vector<1x128xf32>
    %12 = vector.broadcast %11 : vector<1x128xf32> to vector<8x128xf32>
    %13 = arith.addf %10, %12 : vector<8x128xf32>
    %cst_11 = arith.constant 0.000000e+00 : f32
    %14 = vector.broadcast %cst_11 : f32 to vector<8x128xf32>
    %15 = arith.maximumf %13, %14 : vector<8x128xf32>
    %16 = arith.truncf %15 : vector<8x128xf32> to vector<8x128xbf16>
    %c0_12 = arith.constant 0 : index
    %c0_13 = arith.constant 0 : index
    %17 = vector.load %arg6[%c0_12, %c0_13] : memref<128x8xbf16, #tpu.memory_space<vmem>>, vector<128x8xbf16>
    %cst_14 = arith.constant dense<0.000000e+00> : vector<8x8xf32>
    %18 = tpu.matmul %16, %17, %cst_14 {dimension_numbers = #tpu.dot_dimension_numbers<[1], [0], [0], [1], [0, 0, 1, 1], [], []>} : vector<8x128xbf16>, vector<128x8xbf16>, vector<8x8xf32> -> vector<8x8xf32>
    %c0_15 = arith.constant 0 : index
    %c0_16 = arith.constant 0 : index
    %19 = vector.load %arg7[%c0_15, %c0_16] : memref<1x8xf32, #tpu.memory_space<vmem>>, vector<1x8xf32>
    %20 = vector.broadcast %19 : vector<1x8xf32> to vector<8x8xf32>
    %21 = arith.addf %18, %20 : vector<8x8xf32>
    %cst_17 = arith.constant dense<0xFF800000> : vector<8xf32>
    %22 = vector.multi_reduction <maximumf>, %21, %cst_17 [1] : vector<8x8xf32> to vector<8xf32>
    %23 = vector.shape_cast %22 : vector<8xf32> to vector<8x1xf32>
    %24 = vector.broadcast %23 : vector<8x1xf32> to vector<8x8xf32>
    %25 = arith.subf %21, %24 : vector<8x8xf32>
    %26 = math.exp %25 : vector<8x8xf32>
    %cst_18 = arith.constant dense<0.000000e+00> : vector<8xf32>
    %27 = vector.multi_reduction <add>, %26, %cst_18 [1] : vector<8x8xf32> to vector<8xf32>
    %28 = vector.shape_cast %27 : vector<8xf32> to vector<8x1xf32>
    %29 = tpu.reciprocal %28 : vector<8x1xf32> -> vector<8x1xf32>
    %30 = vector.broadcast %29 : vector<8x1xf32> to vector<8x8xf32>
    %31 = arith.mulf %26, %30 : vector<8x8xf32>
    %c0_19 = arith.constant 0 : index
    %c0_20 = arith.constant 0 : index
    %32 = vector.load %arg8[%c0_19, %c0_20] : memref<8x8xf32, #tpu.memory_space<vmem>>, vector<8x8xf32>
    tpu.vector_store %arg8[%c0_19, %c0_20], %31 {strides = array<i32>} : memref<8x8xf32, #tpu.memory_space<vmem>>, vector<8x8xf32>,
    return
  }
  func.func @transform_0(%arg0: i32) -> (i32, i32) {
    %c0_i32 = arith.constant 0 : i32
    %c0_i32_0 = arith.constant 0 : i32
    return %arg0, %c0_i32 : i32, i32
  }
  func.func @transform_1(%arg0: i32) -> (i32, i32) {
    %c0_i32 = arith.constant 0 : i32
    %c0_i32_0 = arith.constant 0 : i32
    %c0_i32_1 = arith.constant 0 : i32
    return %c0_i32, %c0_i32_0 : i32, i32
  }
  func.func @transform_2(%arg0: i32) -> (i32, i32) {
    %c0_i32 = arith.constant 0 : i32
    %c0_i32_0 = arith.constant 0 : i32
    %c0_i32_1 = arith.constant 0 : i32
    return %c0_i32, %c0_i32_0 : i32, i32
  }
  func.func @transform_3(%arg0: i32) -> (i32, i32) {
    %c0_i32 = arith.constant 0 : i32
    %c0_i32_0 = arith.constant 0 : i32
    %c0_i32_1 = arith.constant 0 : i32
    return %c0_i32, %c0_i32_0 : i32, i32
  }
  func.func @transform_4(%arg0: i32) -> (i32, i32) {
    %c0_i32 = arith.constant 0 : i32
    %c0_i32_0 = arith.constant 0 : i32
    %c0_i32_1 = arith.constant 0 : i32
    return %c0_i32, %c0_i32_0 : i32, i32
  }
  func.func @transform_5(%arg0: i32) -> (i32, i32) {
    %c0_i32 = arith.constant 0 : i32
    %c0_i32_0 = arith.constant 0 : i32
    %c0_i32_1 = arith.constant 0 : i32
    return %c0_i32, %c0_i32_0 : i32, i32
  }
  func.func @transform_6(%arg0: i32) -> (i32, i32) {
    %c0_i32 = arith.constant 0 : i32
    %c0_i32_0 = arith.constant 0 : i32
    %c0_i32_1 = arith.constant 0 : i32
    return %c0_i32, %c0_i32_0 : i32, i32
  }
  func.func @transform_7(%arg0: i32) -> (i32, i32) {
    %c0_i32 = arith.constant 0 : i32
    %c0_i32_0 = arith.constant 0 : i32
    return %arg0, %c0_i32 : i32, i32
  }
}

</mosaic_0001>

<llo_original>
// kernel: policy_forward.1
$region0: #{policy_forward.1}
  #allocation0 [shape = 'u32[]', space=smem, size = 0x4, offset = 0x4, fixed_abs, tag = 'smem constant byte address 0x4 - core index']
  #allocation1 [shape = 'u32[72,128]{1,0:T(1,128)}', space=vmem, size = 0x9000, scoped, tag = 'internal scratch']
  %s0 = inlined_call_operand.vmem [shape: bf16[16,80], index: 0, kind: input, shape index: {}]
  %s1 = inlined_call_operand.hbm [shape: bf16[80,128], index: 1, kind: input, shape index: {}]
  %s2 = inlined_call_operand.vmem [shape: f32[1,128], index: 2, kind: input, shape index: {}]
  %s3 = inlined_call_operand.vmem [shape: bf16[128,128], index: 3, kind: input, shape index: {}]
  %s4 = inlined_call_operand.vmem [shape: f32[1,128], index: 4, kind: input, shape index: {}]
  %s5 = inlined_call_operand.vmem [shape: bf16[128,8], index: 5, kind: input, shape index: {}]
  %s6 = inlined_call_operand.vmem [shape: f32[1,8], index: 6, kind: input, shape index: {}]
  %s7 = inlined_call_operand.vmem [shape: f32[16,8], index: 7, kind: output, shape index: {}]
  %s8 = sld [smem:[#allocation0]]
  $region65: #{policy_forward.1} parent=0
    _
  %s10 = ssub.s32 1, %s8
  %s11 = scalar_select 0, %s10, %s8
  $region1: #{policy_forward.1} parent=0
    #allocation2 [shape = 'u8[20480]{0}', space=vmem, size = 0x5000, scoped, tag = 'input window, operand 1, single buffered']
    #allocation3 [shape = 's32[2]{0}', space=sflag, size = 0x8, scoped, tag = 'scoped memory for policy_forward.1']
    %12 = vsyncpa [#allocation3], 0
    loop: start=0, step=1, limit=4
    $region2: #{policy_forward.1} parent=1 // loop_pre_header
      _
    $region3: #{policy_forward.1} parent=1 // loop_header
      %s14 = sphi 0, %s18
      %p15 = scmp.ge.s32.totalorder %s14, 4
      %s24 = sphi 0, %s26
      %s27 = sphi 0, %s24
      %s28 = sphi 0, %s27
      %s44 = sphi 0, %s28
      %s48 = sphi 0, %s48
      %s50 = sphi 0, %s48
      %s51 = sphi 0, %s50
      %s65 = sphi 0, %s51
      %s69 = sphi 0, %s69
      %s71 = sphi 0, %s69
      %s72 = sphi 0, %s71
      %s86 = sphi 0, %s72
      %s90 = sphi 0, %s90
      %s92 = sphi 0, %s90
      %s93 = sphi 0, %s92
      %s107 = sphi 0, %s93
      %s111 = sphi 0, %s111
      %s113 = sphi 0, %s111
      %s114 = sphi 0, %s113
      %s128 = sphi 0, %s114
      %s132 = sphi 0, %s132
      %s134 = sphi 0, %s132
      %s135 = sphi 0, %s134
      %s149 = sphi 0, %s135
      %s153 = sphi 0, %s153
      %s155 = sphi 0, %s153
      %s156 = sphi 0, %s155
      %s170 = sphi 0, %s156
      %s176 = sphi 0, %s178
      %s179 = sphi 0, %s176
      %s180 = sphi 0, %s179
      %s196 = sphi 0, %s180
    $region4: #{policy_forward.1} parent=1 // loop_header_branch
      %17 = sbr.rel (%p15) target = $region8
    $region5: #{policy_forward.1} parent=1 // loop_body
      %s19 = ssub.s32 %s14, 1
      %s20 = ssub.s32 %s14, 2
      %s21 = sadd.s32 %s14, 1
      %s22 = ssub.s32 %s14, %s21
      %p23 = scmp.eq.s32.totalorder %s22, 0
      %s25 = sadd.s32 %s24, 1
      %s26 = scalar_select %p23, %s24, %s25
      %p29 = pneg %p23
      %p30 = scmp.eq.s32.totalorder %s14, 1
      %p31 = por %p29, %p30
      %p32 = scmp.ne.s32.totalorder %s24, %s27
      %p33 = scmp.eq.s32.totalorder %s14, 0
      %p34 = por %p32, %p33
      %p35 = scmp.ne.s32.totalorder %s24, %s27
      %p36 = scmp.eq.s32.totalorder %s19, 1
      %p37 = por %p35, %p36
      %p38 = scmp.ne.s32.totalorder %s27, %s28
      %p39 = scmp.eq.s32.totalorder %s19, 0
      %p40 = por %p38, %p39
      %p41 = scmp.ne.s32.totalorder %s27, %s28
      %p42 = scmp.eq.s32.totalorder %s20, 1
      %p43 = por %p41, %p42
      %p45 = scmp.ne.s32.totalorder %s28, %s44
      %p46 = scmp.eq.s32.totalorder %s20, 0
      %p47 = por %p45, %p46
      %s49 = sadd.s32 %s48, 1
      %p52 = scmp.eq.s32.totalorder %s14, 1
      %p53 = scmp.ne.s32.totalorder %s48, %s50
      %p54 = scmp.eq.s32.totalorder %s14, 0
      %p55 = por %p53, %p54
      %p56 = scmp.ne.s32.totalorder %s48, %s50
      %p57 = scmp.eq.s32.totalorder %s19, 1
      %p58 = por %p56, %p57
      %p59 = scmp.ne.s32.totalorder %s50, %s51
      %p60 = scmp.eq.s32.totalorder %s19, 0
      %p61 = por %p59, %p60
      %p62 = scmp.ne.s32.totalorder %s50, %s51
      %p63 = scmp.eq.s32.totalorder %s20, 1
      %p64 = por %p62, %p63
      %p66 = scmp.ne.s32.totalorder %s51, %s65
      %p67 = scmp.eq.s32.totalorder %s20, 0
      %p68 = por %p66, %p67
      %s70 = sadd.s32 %s69, 1
      %p73 = scmp.eq.s32.totalorder %s14, 1
      %p74 = scmp.ne.s32.totalorder %s69, %s71
      %p75 = scmp.eq.s32.totalorder %s14, 0
      %p76 = por %p74, %p75
      %p77 = scmp.ne.s32.totalorder %s69, %s71
      %p78 = scmp.eq.s32.totalorder %s19, 1
      %p79 = por %p77, %p78
      %p80 = scmp.ne.s32.totalorder %s71, %s72
      %p81 = scmp.eq.s32.totalorder %s19, 0
      %p82 = por %p80, %p81
      %p83 = scmp.ne.s32.totalorder %s71, %s72
      %p84 = scmp.eq.s32.totalorder %s20, 1
      %p85 = por %p83, %p84
      %p87 = scmp.ne.s32.totalorder %s72, %s86
      %p88 = scmp.eq.s32.totalorder %s20, 0
      %p89 = por %p87, %p88
      %s91 = sadd.s32 %s90, 1
      %p94 = scmp.eq.s32.totalorder %s14, 1
      %p95 = scmp.ne.s32.totalorder %s90, %s92
      %p96 = scmp.eq.s32.totalorder %s14, 0
      %p97 = por %p95, %p96
      %p98 = scmp.ne.s32.totalorder %s90, %s92
      %p99 = scmp.eq.s32.totalorder %s19, 1
      %p100 = por %p98, %p99
      %p101 = scmp.ne.s32.totalorder %s92, %s93
      %p102 = scmp.eq.s32.totalorder %s19, 0
      %p103 = por %p101, %p102
      %p104 = scmp.ne.s32.totalorder %s92, %s93
      %p105 = scmp.eq.s32.totalorder %s20, 1
      %p106 = por %p104, %p105
      %p108 = scmp.ne.s32.totalorder %s93, %s107
      %p109 = scmp.eq.s32.totalorder %s20, 0
      %p110 = por %p108, %p109
      %s112 = sadd.s32 %s111, 1
      %p115 = scmp.eq.s32.totalorder %s14, 1
      %p116 = scmp.ne.s32.totalorder %s111, %s113
      %p117 = scmp.eq.s32.totalorder %s14, 0
      %p118 = por %p116, %p117
      %p119 = scmp.ne.s32.totalorder %s111, %s113
      %p120 = scmp.eq.s32.totalorder %s19, 1
      %p121 = por %p119, %p120
      %p122 = scmp.ne.s32.totalorder %s113, %s114
      %p123 = scmp.eq.s32.totalorder %s19, 0
      %p124 = por %p122, %p123
      %p125 = scmp.ne.s32.totalorder %s113, %s114
      %p126 = scmp.eq.s32.totalorder %s20, 1
      %p127 = por %p125, %p126
      %p129 = scmp.ne.s32.totalorder %s114, %s128
      %p130 = scmp.eq.s32.totalorder %s20, 0
      %p131 = por %p129, %p130
      %s133 = sadd.s32 %s132, 1
      %p136 = scmp.eq.s32.totalorder %s14, 1
      %p137 = scmp.ne.s32.totalorder %s132, %s134
      %p138 = scmp.eq.s32.totalorder %s14, 0
      %p139 = por %p137, %p138
      %p140 = scmp.ne.s32.totalorder %s132, %s134
      %p141 = scmp.eq.s32.totalorder %s19, 1
      %p142 = por %p140, %p141
      %p143 = scmp.ne.s32.totalorder %s134, %s135
      %p144 = scmp.eq.s32.totalorder %s19, 0
      %p145 = por %p143, %p144
      %p146 = scmp.ne.s32.totalorder %s134, %s135
      %p147 = scmp.eq.s32.totalorder %s20, 1
      %p148 = por %p146, %p147
      %p150 = scmp.ne.s32.totalorder %s135, %s149
      %p151 = scmp.eq.s32.totalorder %s20, 0
      %p152 = por %p150, %p151
      %s154 = sadd.s32 %s153, 1
      %p157 = scmp.eq.s32.totalorder %s14, 1
      %p158 = scmp.ne.s32.totalorder %s153, %s155
      %p159 = scmp.eq.s32.totalorder %s14, 0
      %p160 = por %p158, %p159
      %p161 = scmp.ne.s32.totalorder %s153, %s155
      %p162 = scmp.eq.s32.totalorder %s19, 1
      %p163 = por %p161, %p162
      %p164 = scmp.ne.s32.totalorder %s155, %s156
      %p165 = scmp.eq.s32.totalorder %s19, 0
      %p166 = por %p164, %p165
      %p167 = scmp.ne.s32.totalorder %s155, %s156
      %p168 = scmp.eq.s32.totalorder %s20, 1
      %p169 = por %p167, %p168
      %p171 = scmp.ne.s32.totalorder %s156, %s170
      %p172 = scmp.eq.s32.totalorder %s20, 0
      %p173 = por %p171, %p172
      %s174 = ssub.s32 %s14, %s21
      %p175 = scmp.eq.s32.totalorder %s174, 0
      %s177 = sadd.s32 %s176, 1
      %s178 = scalar_select %p175, %s176, %s177
      %p181 = pneg %p175
      %p182 = scmp.eq.s32.totalorder %s14, 1
      %p183 = por %p181, %p182
      %p184 = scmp.ne.s32.totalorder %s176, %s179
      %p185 = scmp.eq.s32.totalorder %s14, 0
      %p186 = por %p184, %p185
      %p187 = scmp.ne.s32.totalorder %s176, %s179
      %p188 = scmp.eq.s32.totalorder %s19, 1
      %p189 = por %p187, %p188
      %p190 = scmp.ne.s32.totalorder %s179, %s180
      %p191 = scmp.eq.s32.totalorder %s19, 0
      %p192 = por %p190, %p191
      %p193 = scmp.ne.s32.totalorder %s179, %s180
      %p194 = scmp.eq.s32.totalorder %s20, 1
      %p195 = por %p193, %p194
      %p197 = scmp.ne.s32.totalorder %s180, %s196
      %p198 = scmp.eq.s32.totalorder %s20, 0
      %p199 = por %p197, %p198
      %p200 = scmp.le.s32.totalorder 1, %s14
      %p201 = scmp.lt.s32.totalorder %s14, 3
      %p202 = pnand %p200, %p201
      %p203 = pneg %p202
      // Predicated region
      $region9: #{policy_forward.1} parent=5 // pred_check
        _
      $region10: #{policy_forward.1} parent=5 // pred_check_branch
        %205 = sbr.rel (%p202) target = $region12
      $region11: #{policy_forward.1} parent=5 // pred_region
        %s206 = ssub.s32 %s14, 1
        // Predicated region
        $region13: #{policy_forward.1} parent=11 // pred_check
          %p207 = pneg %p61
        $region14: #{policy_forward.1} parent=11 // pred_check_branch
          %209 = sbr.rel (%p207) target = $region16
        $region15: #{policy_forward.1} parent=11 // pred_region
          %211 = vsyncadd [#allocation3], 0
          %s212 = sshll.u32 %s1, 4
          %s213 = int_to_ptr.hbm [resolvable:$true] %s212
          %s214 = sshll.u32 [#allocation2], 4
          %s215 = int_to_ptr.vmem [resolvable:$true] %s214
          %220 = dma.hbm_to_vmem [thread:$0]  %s213, 640, %s215, [#allocation3], 64, 64, 4
        $region16: #{policy_forward.1} parent=11 // pred_fallthru
          _
        // Predicated region
        $region17: #{policy_forward.1} parent=11 // pred_check
          %p221 = pneg %p82
        $region18: #{policy_forward.1} parent=11 // pred_check_branch
          %223 = sbr.rel (%p221) target = $region20
        $region19: #{policy_forward.1} parent=11 // pred_region
          _
        $region20: #{policy_forward.1} parent=11 // pred_fallthru
          _
        // Predicated region
        $region21: #{policy_forward.1} parent=11 // pred_check
          %p224 = pneg %p103
        $region22: #{policy_forward.1} parent=11 // pred_check_branch
          %226 = sbr.rel (%p224) target = $region24
        $region23: #{policy_forward.1} parent=11 // pred_region
          _
        $region24: #{policy_forward.1} parent=11 // pred_fallthru
          _
        // Predicated region
        $region25: #{policy_forward.1} parent=11 // pred_check
          %p227 = pneg %p124
        $region26: #{policy_forward.1} parent=11 // pred_check_branch
          %229 = sbr.rel (%p227) target = $region28
        $region27: #{policy_forward.1} parent=11 // pred_region
          _
        $region28: #{policy_forward.1} parent=11 // pred_fallthru
          _
        // Predicated region
        $region29: #{policy_forward.1} parent=11 // pred_check
          %p230 = pneg %p145
        $region30: #{policy_forward.1} parent=11 // pred_check_branch
          %232 = sbr.rel (%p230) target = $region32
        $region31: #{policy_forward.1} parent=11 // pred_region
          _
        $region32: #{policy_forward.1} parent=11 // pred_fallthru
          _
        // Predicated region
        $region33: #{policy_forward.1} parent=11 // pred_check
          %p233 = pneg %p166
        $region34: #{policy_forward.1} parent=11 // pred_check_branch
          %235 = sbr.rel (%p233) target = $region36
        $region35: #{policy_forward.1} parent=11 // pred_region
          _
        $region36: #{policy_forward.1} parent=11 // pred_fallthru
          _
      $region12: #{policy_forward.1} parent=5 // pred_fallthru
        _
      %p236 = scmp.lt.s32.totalorder %s14, 2
      // Predicated region
      $region37: #{policy_forward.1} parent=5 // pred_check
        %p237 = pneg %p236
      $region38: #{policy_forward.1} parent=5 // pred_check_branch
        %239 = sbr.rel (%p237) target = $region40
      $region39: #{policy_forward.1} parent=5 // pred_region
        // Predicated region
        $region41: #{policy_forward.1} parent=39 // pred_check
          %p240 = pneg %p34
        $region42: #{policy_forward.1} parent=39 // pred_check_branch
          %242 = sbr.rel (%p240) target = $region44
        $region43: #{policy_forward.1} parent=39 // pred_region
          %p243 = scmp.lt.s32.totalorder %s14, 1
          %s244 = scalar_select %p243, %s14, 1
          %s245 = smul.addr %s244, 4
          %s246 = scalar_lea.vmem %s0, %s245
        $region44: #{policy_forward.1} parent=39 // pred_fallthru
          _
      $region40: #{policy_forward.1} parent=5 // pred_fallthru
        _
      %p247 = scmp.le.s32.totalorder 1, %s14
      %p248 = scmp.lt.s32.totalorder %s14, 3
      %p249 = pnand %p247, %p248
      %p250 = pneg %p249
      // Predicated region
      $region45: #{policy_forward.1} parent=5 // pred_check
        _
      $region46: #{policy_forward.1} parent=5 // pred_check_branch
        %252 = sbr.rel (%p249) target = $region48
      $region47: #{policy_forward.1} parent=5 // pred_region
        %s253 = ssub.s32 %s14, 1
        // Predicated region
        $region49: #{policy_forward.1} parent=47 // pred_check
          %p254 = pneg %p61
        $region50: #{policy_forward.1} parent=47 // pred_check_branch
          %256 = sbr.rel (%p254) target = $region52
        $region51: #{policy_forward.1} parent=47 // pred_region
          %258 = dma.done [#allocation3], 640
        $region52: #{policy_forward.1} parent=47 // pred_fallthru
          _
        %p259 = scmp.lt.s32.totalorder %s19, 1
        %s260 = scalar_select %p259, %s19, 1
        %s261 = smul.addr %s260, 4
        %s262 = scalar_lea.vmem %s0, %s261
        %p263 = pneg %p40
        %p264 = pneg %p37
        %p265 = pneg %p61
        %p266 = pneg %p58
        %p267 = pneg %p82
        %p268 = pneg %p79
        %p269 = pneg %p103
        %p270 = pneg %p100
        %p271 = pneg %p124
        %p272 = pneg %p121
        %p273 = pneg %p145
        %p274 = pneg %p142
        %p275 = pneg %p166
        %p276 = pneg %p163
        %p277 = pneg %p192
        %p278 = pneg %p189
        %p279 = scmp.lt.s32.totalorder %s19, 1
        %s280 = scalar_select %p279, %s19, 1
        %s281 = smul.addr %s280, 8
        %s282 = scalar_lea.vmem %s7, %s281
        %p283 = scmp.lt.s32.totalorder %s19, 1
        %s284 = scalar_select %p283, %s19, 1
        %s285 = smul.addr %s284, 4
        %s286 = scalar_lea.vmem %s0, %s285
        %p287 = scmp.lt.s32.totalorder %s19, 1
        %s288 = scalar_select %p287, %s19, 1
        %s289 = smul.addr %s288, 8
        %s290 = scalar_lea.vmem %s7, %s289
        %v292 = vld [vmem:[%s286] sm:$0xf]
        %v293 = vld [vmem:[#allocation2] sm:$0xf]
        %v294 = vld [vmem:[#allocation2 + $0x4] sm:$0xf]
        %v295 = vld [vmem:[#allocation2 + $0x8] sm:$0xf]
        %v296 = vld [vmem:[#allocation2 + $0xc] sm:$0xf]
        %v297 = vld [vmem:[#allocation2 + $0x10] sm:$0xf]
        %v298 = vld [vmem:[#allocation2 + $0x14] sm:$0xf]
        %v299 = vld [vmem:[#allocation2 + $0x18] sm:$0xf]
        %v300 = vld [vmem:[#allocation2 + $0x1c] sm:$0xf]
        %v301 = vld [vmem:[#allocation2 + $0x20] sm:$0xf]
        %v302 = vld [vmem:[#allocation2 + $0x24] sm:$0xf]
        %v303 = vld [vmem:[%s2] sm:$0x1]
        %v305 = vperm.slane %v303, 0
        %v317 = vunpack.c.l.b16 %v293
        %v318 = vunpack.c.l.b16 %v294
        %v319 = vunpack.c.l.b16 %v295
        %v320 = vunpack.c.l.b16 %v296
        %v321 = vunpack.c.l.b16 %v297
        %v322 = vunpack.c.l.b16 %v298
        %v323 = vunpack.c.l.b16 %v299
        %v324 = vunpack.c.l.b16 %v300
        %v325 = vunpack.c.l.b16 %v301
        %v326 = vunpack.c.l.b16 %v302
        %v327 = vpack.c.b16 %v318, %v317
        %v328 = vpack.c.b16 %v320, %v319
        %v329 = vpack.c.b16 %v322, %v321
        %v330 = vpack.c.b16 %v324, %v323
        %v331 = vpack.c.b16 %v326, %v325
        %vm337 = vcmask 654336
        %v339 = vsel %vm337, %v292, 0
        %341 = vmatpush.bf16.msra.mxu0 0
        %342 = vmatpush.bf16.msra.mxu0 0
        %343 = vmatpush.bf16.msra.mxu0 0
        %344 = vmatpush.bf16.msra.mxu0 %v331
        %345 = vmatpush.bf16.msra.mxu0 %v330
        %346 = vmatpush.bf16.msra.mxu0 %v329
        %347 = vmatpush.bf16.msra.mxu0 %v328
        %348 = vmatpush.bf16.msra.mxu0 %v327
        %349 = vmatmul.bf16.gmra.mxu0 %v339
        %v350 = vpop.f32.mrf.mxu0
        %v351 = vadd.f32 %v305, %v350
        %v352 = vpop.f32.mrf.mxu0
        %353 = vdwg.mxu0
        %v354 = vmax.f32 %v351, 0.0
        %v355 = vpack.c.bf16 %v354, %v354
        %v356 = vld [vmem:[%s3] sm:$0xf]
        %v357 = vld [vmem:[%s3 + $0x4] sm:$0xf]
        %v358 = vld [vmem:[%s3 + $0x8] sm:$0xf]
        %v359 = vld [vmem:[%s3 + $0xc] sm:$0xf]
        %v360 = vld [vmem:[%s3 + $0x10] sm:$0xf]
        %v361 = vld [vmem:[%s3 + $0x14] sm:$0xf]
        %v362 = vld [vmem:[%s3 + $0x18] sm:$0xf]
        %v363 = vld [vmem:[%s3 + $0x1c] sm:$0xf]
        %v364 = vld [vmem:[%s3 + $0x20] sm:$0xf]
        %v365 = vld [vmem:[%s3 + $0x24] sm:$0xf]
        %v366 = vld [vmem:[%s3 + $0x28] sm:$0xf]
        %v367 = vld [vmem:[%s3 + $0x2c] sm:$0xf]
        %v368 = vld [vmem:[%s3 + $0x30] sm:$0xf]
        %v369 = vld [vmem:[%s3 + $0x34] sm:$0xf]
        %v370 = vld [vmem:[%s3 + $0x38] sm:$0xf]
        %v371 = vld [vmem:[%s3 + $0x3c] sm:$0xf]
        %v372 = vld [vmem:[%s4] sm:$0x1]
        %v374 = vperm.slane %v372, 0
        %v392 = vunpack.c.l.b16 %v356
        %v393 = vunpack.c.l.b16 %v357
        %v394 = vunpack.c.l.b16 %v358
        %v395 = vunpack.c.l.b16 %v359
        %v396 = vunpack.c.l.b16 %v360
        %v397 = vunpack.c.l.b16 %v361
        %v398 = vunpack.c.l.b16 %v362
        %v399 = vunpack.c.l.b16 %v363
        %v400 = vunpack.c.l.b16 %v364
        %v401 = vunpack.c.l.b16 %v365
        %v402 = vunpack.c.l.b16 %v366
        %v403 = vunpack.c.l.b16 %v367
        %v404 = vunpack.c.l.b16 %v368
        %v405 = vunpack.c.l.b16 %v369
        %v406 = vunpack.c.l.b16 %v370
        %v407 = vunpack.c.l.b16 %v371
        %v408 = vpack.c.b16 %v393, %v392
        %v409 = vpack.c.b16 %v395, %v394
        %v410 = vpack.c.b16 %v397, %v396
        %v411 = vpack.c.b16 %v399, %v398
        %v412 = vpack.c.b16 %v401, %v400
        %v413 = vpack.c.b16 %v403, %v402
        %v414 = vpack.c.b16 %v405, %v404
        %v415 = vpack.c.b16 %v407, %v406
        %424 = vmatpush.bf16.msra.mxu0 %v415
        %425 = vmatpush.bf16.msra.mxu0 %v414
        %426 = vmatpush.bf16.msra.mxu0 %v413
        %427 = vmatpush.bf16.msra.mxu0 %v412
        %428 = vmatpush.bf16.msra.mxu0 %v411
        %429 = vmatpush.bf16.msra.mxu0 %v410
        %430 = vmatpush.bf16.msra.mxu0 %v409
        %431 = vmatpush.bf16.msra.mxu0 %v408
        %432 = vmatmul.bf16.gmra.mxu0 %v355
        %v433 = vpop.f32.mrf.mxu0
        %v434 = vadd.f32 %v374, %v433
        %v435 = vpop.f32.mrf.mxu0
        %436 = vdwg.mxu0
        %v437 = vmax.f32 %v434, 0.0
        %v438 = vpack.c.bf16 %v437, %v437
        %v439 = vld [vmem:[%s5] sm:$0xf]
        %v440 = vld [vmem:[%s5 + $0x4] sm:$0xf]
        %v441 = vld [vmem:[%s5 + $0x8] sm:$0xf]
        %v442 = vld [vmem:[%s5 + $0xc] sm:$0xf]
        %v443 = vld [vmem:[%s5 + $0x10] sm:$0xf]
        %v444 = vld [vmem:[%s5 + $0x14] sm:$0xf]
        %v445 = vld [vmem:[%s5 + $0x18] sm:$0xf]
        %v446 = vld [vmem:[%s5 + $0x1c] sm:$0xf]
        %v447 = vld [vmem:[%s5 + $0x20] sm:$0xf]
        %v448 = vld [vmem:[%s5 + $0x24] sm:$0xf]
        %v449 = vld [vmem:[%s5 + $0x28] sm:$0xf]
        %v450 = vld [vmem:[%s5 + $0x2c] sm:$0xf]
        %v451 = vld [vmem:[%s5 + $0x30] sm:$0xf]
        %v452 = vld [vmem:[%s5 + $0x34] sm:$0xf]
        %v453 = vld [vmem:[%s5 + $0x38] sm:$0xf]
        %v454 = vld [vmem:[%s5 + $0x3c] sm:$0xf]
        %v455 = vld [vmem:[%s6] sm:$0x1]
        %v457 = vperm.slane %v455, 0
        %v475 = vunpack.c.l.b16 %v439
        %v476 = vunpack.c.l.b16 %v440
        %v477 = vunpack.c.l.b16 %v441
        %v478 = vunpack.c.l.b16 %v442
        %v479 = vunpack.c.l.b16 %v443
        %v480 = vunpack.c.l.b16 %v444
        %v481 = vunpack.c.l.b16 %v445
        %v482 = vunpack.c.l.b16 %v446
        %v483 = vunpack.c.l.b16 %v447
        %v484 = vunpack.c.l.b16 %v448
        %v485 = vunpack.c.l.b16 %v449
        %v486 = vunpack.c.l.b16 %v450
        %v487 = vunpack.c.l.b16 %v451
        %v488 = vunpack.c.l.b16 %v452
        %v489 = vunpack.c.l.b16 %v453
        %v490 = vunpack.c.l.b16 %v454
        %v491 = vpack.c.b16 %v476, %v475
        %v492 = vpack.c.b16 %v478, %v477
        %v493 = vpack.c.b16 %v480, %v479
        %v494 = vpack.c.b16 %v482, %v481
        %v495 = vpack.c.b16 %v484, %v483
        %v496 = vpack.c.b16 %v486, %v485
        %v497 = vpack.c.b16 %v488, %v487
        %v498 = vpack.c.b16 %v490, %v489
        %507 = vmatpush.bf16.msra.mxu0 %v498
        %508 = vmatpush.bf16.msra.mxu0 %v497
        %509 = vmatpush.bf16.msra.mxu0 %v496
        %510 = vmatpush.bf16.msra.mxu0 %v495
        %511 = vmatpush.bf16.msra.mxu0 %v494
        %512 = vmatpush.bf16.msra.mxu0 %v493
        %513 = vmatpush.bf16.msra.mxu0 %v492
        %514 = vmatpush.bf16.msra.mxu0 %v491
        %515 = vmatmul.bf16.gmra.mxu0 %v438
        %v516 = vpop.f32.mrf.mxu0
        %v517 = vadd.f32 %v457, %v516
        %v518 = vpop.f32.mrf.mxu0
        %519 = vdwg.mxu0
        %vm520 = vcmask 64512
        %v521 = vsel %vm520, %v517, -inf
        %522 = vmax.xlane.f32.xlu0 %v521
        %v523 = vpop.xlane.xlu0 %522
        %v524 = vsub.f32 %v517, %v523
        %v525 = vmul.f32 %v524, 1.442695
        %v526 = vpow.pop %v525
        %v527 = vsel %vm520, %v526, 0.0
        %528 = vadd.xlane.f32.xlu0 %v527
        %v529 = vpop.xlane.xlu0 %528
        %v530 = vrcp.pop %v529
        %v531 = vmul.f32 %v529, %v530
        %v532 = vsub.f32 1.0, %v531
        %v533 = vmul.f32 %v530, %v532
        %v534 = vadd.f32 %v530, %v533
        %vm535 = vweird.f32 %v529
        %vm536 = vweird.f32 %v530
        %vm537 = vmor %vm535, %vm536
        %v538 = vsel %vm537, %v530, %v534
        %v539 = vand.u32 2147483647, %v529
        %vm540 = vcmp.eq.f32.partialorder %v539, 8.507059e+37
        %v541 = vand.u32 %v529, 2147483648
        %v542 = vor.u32 1.1754944e-38, %v541
        %v543 = vsel %vm540, %v542, %v538
        %v544 = vmul.f32 %v526, %v543
        %545 = vst.msk [vmem:[%s290] sm:$0xff] %vm520, %v544
        %p546 = scmp.lt.s32.totalorder %s19, 1
        %s547 = scalar_select %p546, %s19, 1
        %s548 = smul.addr %s547, 8
        %s549 = scalar_lea.vmem %s7, %s548
        // Predicated region
        $region53: #{policy_forward.1} parent=47 // pred_check
          %p550 = pneg %p189
        $region54: #{policy_forward.1} parent=47 // pred_check_branch
          %552 = sbr.rel (%p550) target = $region56
        $region55: #{policy_forward.1} parent=47 // pred_region
          _
        $region56: #{policy_forward.1} parent=47 // pred_fallthru
          _
      $region48: #{policy_forward.1} parent=5 // pred_fallthru
        _
      %p553 = scmp.le.s32.totalorder 2, %s14
      // Predicated region
      $region57: #{policy_forward.1} parent=5 // pred_check
        %p554 = pneg %p553
      $region58: #{policy_forward.1} parent=5 // pred_check_branch
        %556 = sbr.rel (%p554) target = $region60
      $region59: #{policy_forward.1} parent=5 // pred_region
        %s557 = ssub.s32 %s14, 2
        // Predicated region
        $region61: #{policy_forward.1} parent=59 // pred_check
          %p558 = pneg %p195
        $region62: #{policy_forward.1} parent=59 // pred_check_branch
          %560 = sbr.rel (%p558) target = $region64
        $region63: #{policy_forward.1} parent=59 // pred_region
          %p561 = scmp.lt.s32.totalorder %s20, 1
          %s562 = scalar_select %p561, %s20, 1
          %s563 = smul.addr %s562, 8
          %s564 = scalar_lea.vmem %s7, %s563
        $region64: #{policy_forward.1} parent=59 // pred_fallthru
          _
      $region60: #{policy_forward.1} parent=5 // pred_fallthru
        _
    $region6: #{policy_forward.1} parent=1 // loop_footer
      %s18 = sadd.s32 1, %s14
    $region7: #{policy_forward.1} parent=1 // loop_footer_branch
      %13 = sbr.rel target = $region3
    $region8: #{policy_forward.1} parent=1 // loop_exit
      _
    %565 = vsyncpa [#allocation3], 1
    %s566 = scalar_lea.sflag [#allocation3], 1
    %567 = vsyncpa %s566, 1

</llo_original>
